<compile_context>
chip_gen: v7x
topology: tpu7x:2x2x1
jax: 0.10.0
libtpu: 0.0.40
codegen_flags: <defaults>
</compile_context>

<pallas_src>
import functools
import math

import jax
import jax.numpy as jnp
from jax import lax
from jax.experimental import pallas as pl
from jax.experimental.pallas import tpu as pltpu


_NEG_BIG = -9.0e15


def _round_up(x: int, m: int) -> int:
    return ((x + m - 1) // m) * m


def _vmem_limit_bytes() -> int:
    cap = 128 << 20
    try:  # stay well under physical VMEM (64 MiB on v7x, 128 MiB on v5e/v6e)
        cap = int(getattr(pltpu.get_tpu_info(), "vmem_capacity_bytes", cap))
    except Exception:
        pass
    return int(min(cap * 3 // 4, 100 << 20))


# --------------------------------------------------------------------------
# Path 1: single block per batch element (small / medium graphs).
# --------------------------------------------------------------------------
def _gat_full_kernel(x_ref, adj_ref, wf_ref, wa2_ref, o_ref, *,
                     f1_col, fpad, alpha, concat, compute_dtype):
    # x_ref:   (1, N, F_in)
    # adj_ref: (1, N, N) int8 edge mask
    # wf_ref:  (F_in, Fw)  = W zero-padded, with W@a1 folded into column f1_col
    # wa2_ref: (1, F_in)   = (W @ a2)^T
    # o_ref:   (1, N, Fpad) lane-dense (Fpad % 128 == 0)
    x = x_ref[0].astype(compute_dtype)
    wf = wf_ref[...].astype(compute_dtype)
    wa2 = wa2_ref[...].astype(compute_dtype)

    # One fused MXU matmul gives h and f1 (f1 lives in the padding column f1_col).
    proj = jnp.dot(x, wf, preferred_element_type=jnp.float32)      # (N, Fw)
    h = proj[:, :fpad]                                             # (N, Fpad)
    f1 = proj[:, f1_col:f1_col + 1]                                # (N, 1)

    # f2 directly in ROW layout (1, N): contract the feature axis of x with W@a2
    # (rhs-transposed contraction) -- no in-kernel transpose/relayout.
    f2 = lax.dot_general(wa2, x, (((1,), (1,)), ((), ())),
                         preferred_element_type=jnp.float32)       # (1, N)

    z = f1 + f2                                                    # (N, N)
    e = jnp.where(z > 0.0, z, alpha * z)                           # LeakyReLU
    s = jnp.where(adj_ref[0] != 0, e, _NEG_BIG)                    # adjacency mask

    m = jnp.max(s, axis=-1, keepdims=True)
    p = jnp.exp(s - m)
    denom = jnp.sum(p, axis=-1, keepdims=True)
    inv = pl.reciprocal(denom, approx=True)        # EUP vrcp (free slot)
    inv = inv * (2.0 - denom * inv)                # one Newton step -> ~f32 accurate
    p = p * inv

    # TODO(synk): training-mode dropout on the attention probs is not implemented
    # (eval-mode dropout is the identity).
    hp = jnp.dot(p.astype(compute_dtype), h.astype(compute_dtype),
                 preferred_element_type=jnp.float32)               # (N, Fpad)
    if concat:
        # ELU(alpha=1): e^x - 1 == 2*t / (1 - t), t = tanh(x/2) (expm1 accuracy).
        t = jnp.tanh(0.5 * jnp.minimum(hp, 0.0))
        hp = jnp.where(hp > 0.0, hp, 2.0 * t / (1.0 - t))
    o_ref[0] = hp.astype(o_ref.dtype)


def _gat_full_call(x, adj_i8, W, a1, a2, *, alpha, concat, compute_dtype):
    B, N, Fin = x.shape
    Fout = W.shape[1]
    fpad = _round_up(Fout, 128)            # lane-dense output width
    fw = _round_up(Fout + 1, 128)          # == fpad unless Fout % 128 == 0
    n_pad = _round_up(N, 8)                # sublane-align the (N, N) intermediates

    if n_pad != N:
        x = jnp.pad(x, ((0, 0), (0, n_pad - N), (0, 0)))
        adj_i8 = jnp.pad(adj_i8, ((0, 0), (0, n_pad - N), (0, n_pad - N)))

    # Fold a1 into the padding column `Fout` of the padded weight: h and f1 come
    # from ONE x @ wf matmul whose width is an exact 128 multiple.
    wf = jnp.zeros((Fin, fw), dtype=W.dtype)
    wf = wf.at[:, :Fout].set(W)
    wf = wf.at[:, Fout].set((W @ a1)[:, 0])
    wa2_row = (W @ a2).T                                            # (1, Fin)

    kernel = functools.partial(_gat_full_kernel, f1_col=Fout, fpad=fpad,
                               alpha=alpha, concat=concat,
                               compute_dtype=compute_dtype)
    out = pl.pallas_call(
        kernel,
        out_shape=jax.ShapeDtypeStruct((B, n_pad, fpad), jnp.float32),
        grid_spec=pltpu.PrefetchScalarGridSpec(
            num_scalar_prefetch=0,
            grid=(B,),
            in_specs=[
                pl.BlockSpec((1, n_pad, Fin), lambda b: (b, 0, 0)),    # x
                pl.BlockSpec((1, n_pad, n_pad), lambda b: (b, 0, 0)),  # adj (int8)
                pl.BlockSpec((Fin, fw), lambda b: (0, 0)),             # fused W|W@a1
                pl.BlockSpec((1, Fin), lambda b: (0, 0)),              # (W@a2)^T
            ],
            out_specs=pl.BlockSpec((1, n_pad, fpad), lambda b: (b, 0, 0)),
        ),
        compiler_params=pltpu.CompilerParams(
            dimension_semantics=("parallel",),
            vmem_limit_bytes=_vmem_limit_bytes()),
    )(x, adj_i8, wf, wa2_row)
    return out[:, :N, :Fout]


# --------------------------------------------------------------------------
# Path 2: key/query-tiled online softmax (large graphs).
# --------------------------------------------------------------------------
def _gat_tiled_kernel(xq_ref, xk_ref, adj_ref, w_ref, wa1_ref, wa2_ref, o_ref,
                      f1_sc, m_sc, l_sc, acc_sc, *, alpha, concat, compute_dtype):
    ki = pl.program_id(2)

    @pl.when(ki == 0)
    def _():
        xq = xq_ref[0].astype(compute_dtype)
        f1_sc[...] = jnp.dot(xq, wa1_ref[...].astype(compute_dtype),
                             preferred_element_type=jnp.float32)    # (TQ, 1)
        m_sc[...] = jnp.full(m_sc.shape, -jnp.inf, jnp.float32)
        l_sc[...] = jnp.zeros(l_sc.shape, jnp.float32)
        acc_sc[...] = jnp.zeros(acc_sc.shape, jnp.float32)

    xk = xk_ref[0].astype(compute_dtype)
    w = w_ref[...].astype(compute_dtype)
    # TODO(synk): for large F_in, precompute h = x @ W once in a separate pass
    # instead of re-projecting the key tile for every query tile.
    h_k = jnp.dot(xk, w, preferred_element_type=jnp.float32)        # (TK, Fpad)
    f2 = lax.dot_general(wa2_ref[...].astype(compute_dtype), xk,
                         (((1,), (1,)), ((), ())),
                         preferred_element_type=jnp.float32)        # (1, TK)

    z = f1_sc[...] + f2                                             # (TQ, TK)
    e = jnp.where(z > 0.0, z, alpha * z)                            # LeakyReLU
    s = jnp.where(adj_ref[0] != 0, e, _NEG_BIG)                     # adjacency mask

    m_prev = m_sc[...]
    m_new = jnp.maximum(m_prev, jnp.max(s, axis=-1, keepdims=True))
    corr = jnp.exp(m_prev - m_new)
    p = jnp.exp(s - m_new)
    l_sc[...] = corr * l_sc[...] + jnp.sum(p, axis=-1, keepdims=True)
    acc_sc[...] = corr * acc_sc[...] + jnp.dot(
        p.astype(compute_dtype), h_k.astype(compute_dtype),
        preferred_element_type=jnp.float32)
    m_sc[...] = m_new

    @pl.when(ki == pl.num_programs(2) - 1)
    def _():
        denom = l_sc[...]
        inv = pl.reciprocal(denom, approx=True)
        inv = inv * (2.0 - denom * inv)
        hp = acc_sc[...] * inv
        if concat:
            t = jnp.tanh(0.5 * jnp.minimum(hp, 0.0))
            hp = jnp.where(hp > 0.0, hp, 2.0 * t / (1.0 - t))
        o_ref[0] = hp.astype(o_ref.dtype)


def _gat_tiled_call(x, adj_i8, W, a1, a2, *, alpha, concat, compute_dtype,
                    block_q, block_k):
    B, N, Fin = x.shape
    Fout = W.shape[1]
    fpad = _round_up(Fout, 128)

    if N <= block_q and N <= block_k:          # degenerate single-tile case
        n_pad = _round_up(N, 8)
        bq = bk = n_pad
    else:
        n_pad = _round_up(N, math.lcm(block_q, block_k))
        bq, bk = block_q, block_k

    if n_pad != N:
        x = jnp.pad(x, ((0, 0), (0, n_pad - N), (0, 0)))
        adj_i8 = jnp.pad(adj_i8, ((0, 0), (0, n_pad - N), (0, n_pad - N)))
    x = x.astype(compute_dtype)   # halves re-read HBM traffic when bf16

    w_pad = jnp.pad(W, ((0, 0), (0, fpad - Fout)))                  # (Fin, Fpad)
    wa1 = W @ a1                                                    # (Fin, 1)
    wa2_row = (W @ a2).T                                            # (1, Fin)

    kernel = functools.partial(_gat_tiled_kernel, alpha=alpha, concat=concat,
                               compute_dtype=compute_dtype)
    out = pl.pallas_call(
        kernel,
        out_shape=jax.ShapeDtypeStruct((B, n_pad, fpad), jnp.float32),
        grid_spec=pltpu.PrefetchScalarGridSpec(
            num_scalar_prefetch=0,
            grid=(B, n_pad // bq, n_pad // bk),
            in_specs=[
                pl.BlockSpec((1, bq, Fin), lambda b, qi, ki: (b, qi, 0)),   # x (q)
                pl.BlockSpec((1, bk, Fin), lambda b, qi, ki: (b, ki, 0)),   # x (k)
                pl.BlockSpec((1, bq, bk), lambda b, qi, ki: (b, qi, ki)),   # adj i8
                pl.BlockSpec((Fin, fpad), lambda b, qi, ki: (0, 0)),        # W pad
                pl.BlockSpec((Fin, 1), lambda b, qi, ki: (0, 0)),           # W @ a1
                pl.BlockSpec((1, Fin), lambda b, qi, ki: (0, 0)),           # (W@a2)^T
            ],
            out_specs=pl.BlockSpec((1, bq, fpad), lambda b, qi, ki: (b, qi, 0)),
            scratch_shapes=[
                pltpu.VMEM((bq, 1), jnp.float32),     # f1 for current query tile
                pltpu.VMEM((bq, 1), jnp.float32),     # running max
                pltpu.VMEM((bq, 1), jnp.float32),     # running denom
                pltpu.VMEM((bq, fpad), jnp.float32),  # output accumulator
            ],
        ),
        compiler_params=pltpu.CompilerParams(
            dimension_semantics=("parallel", "parallel", "arbitrary"),
            vmem_limit_bytes=_vmem_limit_bytes()),
    )(x, x, adj_i8, w_pad, wa1, wa2_row)
    return out[:, :N, :Fout]


# --------------------------------------------------------------------------
# Public wrapper.
# --------------------------------------------------------------------------
def graph_attention(inputs, adj, W, a1, a2, *, alpha=0.2, concat=True,
                    compute_dtype=jnp.bfloat16, block_q=128, block_k=128,
                    max_untiled_nodes=512):
    """GAT forward (eval mode).

    inputs: (B, N, F_in); adj: (B, N, N), any dtype (entries > 0 are edges);
    W: (F_in, F_out); a1, a2: (F_out, 1).

    compute_dtype is the MXU operand dtype (accumulation & softmax stay f32);
    bfloat16 is the default on all TPU generations, pass jnp.float32 for tight
    agreement with an f32 reference.  Graphs with N <= max_untiled_nodes run a
    single fused block per batch element; larger graphs use the key/query-tiled
    online-softmax kernel (VMEM working set O(block_q*block_k), not O(N^2)).
    """
    # TODO(synk): training-mode attention dropout and return_attention=True are
    # not implemented (eval-mode dropout is the identity).
    adj_i8 = (adj > 0).astype(jnp.int8)
    if inputs.shape[1] <= max_untiled_nodes:
        return _gat_full_call(inputs, adj_i8, W, a1, a2, alpha=alpha,
                              concat=concat, compute_dtype=compute_dtype)
    return _gat_tiled_call(inputs, adj_i8, W, a1, a2, alpha=alpha, concat=concat,
                           compute_dtype=compute_dtype,
                           block_q=block_q, block_k=block_k)


def _reference(inputs, adj, W, a1, a2, *, alpha=0.2):
    # Pure-JAX mirror of the PyTorch forward (eval mode, concat=True).
    h = inputs @ W
    f1 = h @ a1
    f2 = h @ a2
    z = f1 + jnp.swapaxes(f2, -2, -1)
    e = jnp.where(z > 0.0, z, alpha * z)
    att = jnp.where(adj > 0.0, e, -9.0e15)
    att = jax.nn.softmax(att, axis=-1)
    hp = att @ h
    return jnp.where(hp > 0.0, hp, jnp.expm1(hp))   # ELU(alpha=1)


def _make_case(key, B, N, Fin, Fout):
    k_x, k_adj, k_w, k_a1, k_a2 = jax.random.split(key, 5)
    inputs = jax.random.normal(k_x, (B, N, Fin), dtype=jnp.float32)
    adj = jax.random.bernoulli(k_adj, 0.5, (B, N, N)).astype(jnp.float32)
    adj = jnp.maximum(adj, jnp.eye(N, dtype=jnp.float32)[None])   # self-loops
    # Deterministic stand-ins for torch xavier_normal_(gain=sqrt(2)) init.
    std_w = math.sqrt(2.0) * math.sqrt(2.0 / (Fin + Fout))
    std_a = math.sqrt(2.0) * math.sqrt(2.0 / (Fout + 1))
    W = std_w * jax.random.normal(k_w, (Fin, Fout), dtype=jnp.float32)
    a1 = std_a * jax.random.normal(k_a1, (Fout, 1), dtype=jnp.float32)
    a2 = std_a * jax.random.normal(k_a2, (Fout, 1), dtype=jnp.float32)
    return inputs, adj, W, a1, a2


if __name__ == "__main__":
    alpha = 0.2
    k1, k2 = jax.random.split(jax.random.PRNGKey(0))

    # Case 1: small graph -> single-block kernel (a1 folded into padding column).
    inputs, adj, W, a1, a2 = _make_case(k1, B=2, N=16, Fin=32, Fout=32)
    ref = _reference(inputs, adj, W, a1, a2, alpha=alpha)
    out_f32 = jax.block_until_ready(graph_attention(
        inputs, adj, W, a1, a2, alpha=alpha, compute_dtype=jnp.float32))
    out_bf16 = jax.block_until_ready(graph_attention(
        inputs, adj, W, a1, a2, alpha=alpha))               # bf16 default
    assert out_f32.shape == ref.shape
    assert jnp.allclose(out_f32, ref, atol=2e-3, rtol=2e-3), "full f32 mismatch"
    assert jnp.allclose(out_bf16, ref, atol=1e-1, rtol=5e-2), "full bf16 mismatch"

    # Case 2: larger, non-128-aligned graph -> tiled online-softmax kernel
    # (forced via max_untiled_nodes=0); exercises N padding 200 -> 256.
    inputs, adj, W, a1, a2 = _make_case(k2, B=2, N=200, Fin=48, Fout=64)
    ref = _reference(inputs, adj, W, a1, a2, alpha=alpha)
    out_f32 = jax.block_until_ready(graph_attention(
        inputs, adj, W, a1, a2, alpha=alpha, compute_dtype=jnp.float32,
        max_untiled_nodes=0))
    out_bf16 = jax.block_until_ready(graph_attention(
        inputs, adj, W, a1, a2, alpha=alpha, max_untiled_nodes=0))
    assert out_f32.shape == ref.shape
    assert jnp.allclose(out_f32, ref, atol=2e-3, rtol=2e-3), "tiled f32 mismatch"
    assert jnp.allclose(out_bf16, ref, atol=1e-1, rtol=5e-2), "tiled bf16 mismatch"

    print("KERNEL_OK")
</pallas_src>

<mosaic_0001>
module attributes {stable_mosaic.version = 11 : i64} {
  func.func @_gat_full_kernel(%arg0: i32, %arg1: memref<1x16x32xf32, #tpu.memory_space<vmem>>, %arg2: memref<1x16x16xi8, #tpu.memory_space<vmem>>, %arg3: memref<32x128xf32, #tpu.memory_space<vmem>>, %arg4: memref<1x32xf32, #tpu.memory_space<vmem>>, %arg5: memref<1x16x128xf32, #tpu.memory_space<vmem>>) attributes {dimension_semantics = [#tpu.dimension_semantics<parallel>], iteration_bounds = array<i64: 2>, scalar_prefetch = 0 : i64, scratch_operands = 0 : i64, tpu.core_type = #tpu.core_type<tc>, window_params = [{transform_indices = @transform_0, window_bounds = array<i64: 1, 16, 32>}, {transform_indices = @transform_1, window_bounds = array<i64: 1, 16, 16>}, {pipeline_mode = #tpu.pipeline_mode<synchronous>, transform_indices = @transform_2, window_bounds = array<i64: 32, 128>}, {pipeline_mode = #tpu.pipeline_mode<synchronous>, transform_indices = @transform_3, window_bounds = array<i64: 1, 32>}, {transform_indices = @transform_4, window_bounds = array<i64: 1, 16, 128>}]} {
    %c0 = arith.constant 0 : index
    %c0_0 = arith.constant 0 : index
    %c0_1 = arith.constant 0 : index
    %0 = vector.load %arg1[%c0, %c0_0, %c0_1] : memref<1x16x32xf32, #tpu.memory_space<vmem>>, vector<1x16x32xf32>
    %1 = vector.shape_cast %0 : vector<1x16x32xf32> to vector<16x32xf32>
    %c0_2 = arith.constant 0 : index
    %c0_3 = arith.constant 0 : index
    %2 = vector.load %arg3[%c0_2, %c0_3] : memref<32x128xf32, #tpu.memory_space<vmem>>, vector<32x128xf32>
    %c0_4 = arith.constant 0 : index
    %c0_5 = arith.constant 0 : index
    %3 = vector.load %arg4[%c0_4, %c0_5] : memref<1x32xf32, #tpu.memory_space<vmem>>, vector<1x32xf32>
    %cst = arith.constant dense<0.000000e+00> : vector<16x128xf32>
    %4 = tpu.matmul %1, %2, %cst {dimension_numbers = #tpu.dot_dimension_numbers<[1], [0], [0], [1], [0, 0, 1, 1], [], []>} : vector<16x32xf32>, vector<32x128xf32>, vector<16x128xf32> -> vector<16x128xf32>
    %5 = vector.extract_strided_slice %4 {offsets = [0, 32], sizes = [16, 1], strides = [1, 1]} : vector<16x128xf32> to vector<16x1xf32>
    %cst_6 = arith.constant dense<0.000000e+00> : vector<1x16xf32>
    %6 = tpu.matmul %3, %1, %cst_6 {dimension_numbers = #tpu.dot_dimension_numbers<[1], [1], [0], [0], [0, 0, 1, 0], [], []>} : vector<1x32xf32>, vector<16x32xf32>, vector<1x16xf32> -> vector<1x16xf32>
    %7 = vector.broadcast %5 : vector<16x1xf32> to vector<16x16xf32>
    %8 = vector.broadcast %6 : vector<1x16xf32> to vector<16x16xf32>
    %9 = arith.addf %7, %8 : vector<16x16xf32>
    %cst_7 = arith.constant 0.000000e+00 : f32
    %10 = vector.broadcast %cst_7 : f32 to vector<16x16xf32>
    %11 = arith.cmpf ogt, %9, %10 : vector<16x16xf32>
    %cst_8 = arith.constant 2.000000e-01 : f32
    %12 = vector.broadcast %cst_8 : f32 to vector<16x16xf32>
    %13 = arith.mulf %12, %9 : vector<16x16xf32>
    %14 = arith.select %11, %9, %13 : vector<16x16xi1>, vector<16x16xf32>
    %c0_9 = arith.constant 0 : index
    %c0_10 = arith.constant 0 : index
    %c0_11 = arith.constant 0 : index
    %15 = vector.load %arg2[%c0_9, %c0_10, %c0_11] : memref<1x16x16xi8, #tpu.memory_space<vmem>>, vector<1x16x16xi8>
    %16 = vector.shape_cast %15 : vector<1x16x16xi8> to vector<16x16xi8>
    %c0_i8 = arith.constant 0 : i8
    %17 = vector.broadcast %c0_i8 : i8 to vector<16x16xi8>
    %18 = arith.cmpi ne, %16, %17 : vector<16x16xi8>
    %cst_12 = arith.constant -9.000000e+15 : f32
    %19 = vector.broadcast %cst_12 : f32 to vector<16x16xf32>
    %20 = arith.select %18, %14, %19 : vector<16x16xi1>, vector<16x16xf32>
    %cst_13 = arith.constant dense<0xFF800000> : vector<16xf32>
    %21 = vector.multi_reduction <maximumf>, %20, %cst_13 [1] : vector<16x16xf32> to vector<16xf32>
    %22 = vector.shape_cast %21 : vector<16xf32> to vector<16x1xf32>
    %23 = vector.broadcast %22 : vector<16x1xf32> to vector<16x16xf32>
    %24 = arith.subf %20, %23 : vector<16x16xf32>
    %25 = math.exp %24 : vector<16x16xf32>
    %cst_14 = arith.constant dense<0.000000e+00> : vector<16xf32>
    %26 = vector.multi_reduction <add>, %25, %cst_14 [1] : vector<16x16xf32> to vector<16xf32>
    %27 = vector.shape_cast %26 : vector<16xf32> to vector<16x1xf32>
    %28 = tpu.reciprocal %27 {approx = true} : vector<16x1xf32> -> vector<16x1xf32>
    %29 = arith.mulf %27, %28 : vector<16x1xf32>
    %cst_15 = arith.constant 2.000000e+00 : f32
    %30 = vector.broadcast %cst_15 : f32 to vector<16x1xf32>
    %31 = arith.subf %30, %29 : vector<16x1xf32>
    %32 = arith.mulf %28, %31 : vector<16x1xf32>
    %33 = vector.broadcast %32 : vector<16x1xf32> to vector<16x16xf32>
    %34 = arith.mulf %25, %33 : vector<16x16xf32>
    %cst_16 = arith.constant dense<0.000000e+00> : vector<16x128xf32>
    %35 = tpu.matmul %34, %4, %cst_16 {dimension_numbers = #tpu.dot_dimension_numbers<[1], [0], [0], [1], [0, 0, 1, 1], [], []>} : vector<16x16xf32>, vector<16x128xf32>, vector<16x128xf32> -> vector<16x128xf32>
    %cst_17 = arith.constant 0.000000e+00 : f32
    %36 = vector.broadcast %cst_17 : f32 to vector<16x128xf32>
    %37 = arith.minimumf %35, %36 : vector<16x128xf32>
    %cst_18 = arith.constant 5.000000e-01 : f32
    %38 = vector.broadcast %cst_18 : f32 to vector<16x128xf32>
    %39 = arith.mulf %38, %37 : vector<16x128xf32>
    %40 = math.tanh %39 : vector<16x128xf32>
    %cst_19 = arith.constant 0.000000e+00 : f32
    %41 = vector.broadcast %cst_19 : f32 to vector<16x128xf32>
    %42 = arith.cmpf ogt, %35, %41 : vector<16x128xf32>
    %cst_20 = arith.constant 2.000000e+00 : f32
    %43 = vector.broadcast %cst_20 : f32 to vector<16x128xf32>
    %44 = arith.mulf %43, %40 : vector<16x128xf32>
    %cst_21 = arith.constant 1.000000e+00 : f32
    %45 = vector.broadcast %cst_21 : f32 to vector<16x128xf32>
    %46 = arith.subf %45, %40 : vector<16x128xf32>
    %47 = arith.divf %44, %46 : vector<16x128xf32>
    %48 = arith.select %42, %35, %47 : vector<16x128xi1>, vector<16x128xf32>
    %c0_22 = arith.constant 0 : index
    %c0_23 = arith.constant 0 : index
    %c0_24 = arith.constant 0 : index
    %49 = vector.load %arg5[%c0_22, %c0_23, %c0_24] : memref<1x16x128xf32, #tpu.memory_space<vmem>>, vector<1x16x128xf32>
    %50 = vector.shape_cast %49 : vector<1x16x128xf32> to vector<16x128xf32>
    %51 = vector.shape_cast %48 : vector<16x128xf32> to vector<1x16x128xf32>
    tpu.vector_store %arg5[%c0_22, %c0_23, %c0_24], %51 {strides = array<i32>} : memref<1x16x128xf32, #tpu.memory_space<vmem>>, vector<1x16x128xf32>,
    return
  }
  func.func @transform_0(%arg0: i32) -> (i32, i32, i32) {
    %c0_i32 = arith.constant 0 : i32
    %c0_i32_0 = arith.constant 0 : i32
    %c0_i32_1 = arith.constant 0 : i32
    return %arg0, %c0_i32, %c0_i32_0 : i32, i32, i32
  }
  func.func @transform_1(%arg0: i32) -> (i32, i32, i32) {
    %c0_i32 = arith.constant 0 : i32
    %c0_i32_0 = arith.constant 0 : i32
    %c0_i32_1 = arith.constant 0 : i32
    return %arg0, %c0_i32, %c0_i32_0 : i32, i32, i32
  }
  func.func @transform_2(%arg0: i32) -> (i32, i32) {
    %c0_i32 = arith.constant 0 : i32
    %c0_i32_0 = arith.constant 0 : i32
    %c0_i32_1 = arith.constant 0 : i32
    return %c0_i32, %c0_i32_0 : i32, i32
  }
  func.func @transform_3(%arg0: i32) -> (i32, i32) {
    %c0_i32 = arith.constant 0 : i32
    %c0_i32_0 = arith.constant 0 : i32
    %c0_i32_1 = arith.constant 0 : i32
    return %c0_i32, %c0_i32_0 : i32, i32
  }
  func.func @transform_4(%arg0: i32) -> (i32, i32, i32) {
    %c0_i32 = arith.constant 0 : i32
    %c0_i32_0 = arith.constant 0 : i32
    %c0_i32_1 = arith.constant 0 : i32
    return %arg0, %c0_i32, %c0_i32_0 : i32, i32, i32
  }
}

</mosaic_0001>

<llo_original>
// kernel: tpu_custom_call.1
$region0: #{tpu_custom_call.1}
  #allocation0 [shape = 'u32[]', space=smem, size = 0x4, offset = 0x4, fixed_abs, tag = 'smem constant byte address 0x4 - core index']
  #allocation1 [shape = 'u32[144,128]{1,0:T(1,128)}', space=vmem, size = 0x12000, scoped, tag = 'internal scratch']
  %s0 = inlined_call_operand.hbm [shape: f32[2,16,32], index: 0, kind: input, shape index: {}]
  %s1 = inlined_call_operand.hbm [shape: s8[2,16,16], index: 1, kind: input, shape index: {}]
  %s2 = inlined_call_operand.hbm [shape: f32[32,128], index: 2, kind: input, shape index: {}]
  %s3 = inlined_call_operand.hbm [shape: f32[1,32], index: 3, kind: input, shape index: {}]
  %s4 = inlined_call_operand.hbm [shape: f32[2,16,128], index: 4, kind: output, shape index: {}]
  %s5 = sld [smem:[#allocation0]]
  $region65: #{tpu_custom_call.1} parent=0
    _
  %s7 = ssub.s32 1, %s5
  %s8 = scalar_select 0, %s7, %s5
  $region1: #{tpu_custom_call.1} parent=0
    #allocation2 [shape = 'u8[16384]{0}', space=vmem, size = 0x4000, scoped, tag = 'input window, operand 0']
    #allocation3 [shape = 's32[2]{0}', space=sflag, size = 0x8, scoped, tag = 'scoped memory for tpu_custom_call.1']
    #allocation4 [shape = 's32[2]{0}', space=sflag, size = 0x8, scoped, tag = 'scoped memory for tpu_custom_call.1']
    #allocation5 [shape = 'u8[4096]{0}', space=vmem, size = 0x1000, scoped, tag = 'input window, operand 1']
    #allocation6 [shape = 's32[2]{0}', space=sflag, size = 0x8, scoped, tag = 'scoped memory for tpu_custom_call.1']
    #allocation7 [shape = 'u8[16384]{0}', space=vmem, size = 0x4000, scoped, tag = 'input window, operand 2, single buffered']
    #allocation8 [shape = 'u8[512]{0}', space=vmem, size = 0x400, scoped, tag = 'input window, operand 3, single buffered']
    #allocation9 [shape = 's32[1]{0}', space=sflag, size = 0x4, scoped, tag = 'scoped memory for tpu_custom_call.1']
    #allocation10 [shape = 'u8[16384]{0}', space=vmem, size = 0x4000, scoped, tag = 'output window, operand 0']
    %9 = vsyncpa [#allocation3], 0
    %s10 = scalar_lea.sflag [#allocation3], 1
    %11 = vsyncpa %s10, 0
    %12 = vsyncpa [#allocation6], 0
    %s13 = scalar_lea.sflag [#allocation6], 1
    %14 = vsyncpa %s13, 0
    %15 = vsyncpa [#allocation9], 0
    %16 = vsyncpa [#allocation4], 0
    %s17 = scalar_lea.sflag [#allocation4], 1
    %18 = vsyncpa %s17, 0
    loop: start=0, step=1, limit=4
    $region2: #{tpu_custom_call.1} parent=1 // loop_pre_header
      _
    $region3: #{tpu_custom_call.1} parent=1 // loop_header
      %s20 = sphi 0, %s24
      %p21 = scmp.ge.s32.totalorder %s20, 4
      %s30 = sphi 0, %s32
      %s33 = sphi 0, %s30
      %s34 = sphi 0, %s33
      %s50 = sphi 0, %s34
      %s56 = sphi 0, %s58
      %s59 = sphi 0, %s56
      %s60 = sphi 0, %s59
      %s76 = sphi 0, %s60
      %s80 = sphi 0, %s80
      %s82 = sphi 0, %s80
      %s83 = sphi 0, %s82
      %s97 = sphi 0, %s83
      %s101 = sphi 0, %s101
      %s103 = sphi 0, %s101
      %s104 = sphi 0, %s103
      %s118 = sphi 0, %s104
      %s124 = sphi 0, %s126
      %s127 = sphi 0, %s124
      %s128 = sphi 0, %s127
      %s144 = sphi 0, %s128
    $region4: #{tpu_custom_call.1} parent=1 // loop_header_branch
      %23 = sbr.rel (%p21) target = $region8
    $region5: #{tpu_custom_call.1} parent=1 // loop_body
      %s25 = ssub.s32 %s20, 1
      %s26 = ssub.s32 %s20, 2
      %s27 = sadd.s32 %s20, 1
      %s28 = ssub.s32 %s20, %s27
      %p29 = scmp.eq.s32.totalorder %s28, 0
      %s31 = sadd.s32 %s30, 1
      %s32 = scalar_select %p29, %s30, %s31
      %p35 = pneg %p29
      %p36 = scmp.eq.s32.totalorder %s20, 1
      %p37 = por %p35, %p36
      %p38 = scmp.ne.s32.totalorder %s30, %s33
      %p39 = scmp.eq.s32.totalorder %s20, 0
      %p40 = por %p38, %p39
      %p41 = scmp.ne.s32.totalorder %s30, %s33
      %p42 = scmp.eq.s32.totalorder %s25, 1
      %p43 = por %p41, %p42
      %p44 = scmp.ne.s32.totalorder %s33, %s34
      %p45 = scmp.eq.s32.totalorder %s25, 0
      %p46 = por %p44, %p45
      %p47 = scmp.ne.s32.totalorder %s33, %s34
      %p48 = scmp.eq.s32.totalorder %s26, 1
      %p49 = por %p47, %p48
      %p51 = scmp.ne.s32.totalorder %s34, %s50
      %p52 = scmp.eq.s32.totalorder %s26, 0
      %p53 = por %p51, %p52
      %s54 = ssub.s32 %s20, %s27
      %p55 = scmp.eq.s32.totalorder %s54, 0
      %s57 = sadd.s32 %s56, 1
      %s58 = scalar_select %p55, %s56, %s57
      %p61 = pneg %p55
      %p62 = scmp.eq.s32.totalorder %s20, 1
      %p63 = por %p61, %p62
      %p64 = scmp.ne.s32.totalorder %s56, %s59
      %p65 = scmp.eq.s32.totalorder %s20, 0
      %p66 = por %p64, %p65
      %p67 = scmp.ne.s32.totalorder %s56, %s59
      %p68 = scmp.eq.s32.totalorder %s25, 1
      %p69 = por %p67, %p68
      %p70 = scmp.ne.s32.totalorder %s59, %s60
      %p71 = scmp.eq.s32.totalorder %s25, 0
      %p72 = por %p70, %p71
      %p73 = scmp.ne.s32.totalorder %s59, %s60
      %p74 = scmp.eq.s32.totalorder %s26, 1
      %p75 = por %p73, %p74
      %p77 = scmp.ne.s32.totalorder %s60, %s76
      %p78 = scmp.eq.s32.totalorder %s26, 0
      %p79 = por %p77, %p78
      %s81 = sadd.s32 %s80, 1
      %p84 = scmp.eq.s32.totalorder %s20, 1
      %p85 = scmp.ne.s32.totalorder %s80, %s82
      %p86 = scmp.eq.s32.totalorder %s20, 0
      %p87 = por %p85, %p86
      %p88 = scmp.ne.s32.totalorder %s80, %s82
      %p89 = scmp.eq.s32.totalorder %s25, 1
      %p90 = por %p88, %p89
      %p91 = scmp.ne.s32.totalorder %s82, %s83
      %p92 = scmp.eq.s32.totalorder %s25, 0
      %p93 = por %p91, %p92
      %p94 = scmp.ne.s32.totalorder %s82, %s83
      %p95 = scmp.eq.s32.totalorder %s26, 1
      %p96 = por %p94, %p95
      %p98 = scmp.ne.s32.totalorder %s83, %s97
      %p99 = scmp.eq.s32.totalorder %s26, 0
      %p100 = por %p98, %p99
      %s102 = sadd.s32 %s101, 1
      %p105 = scmp.eq.s32.totalorder %s20, 1
      %p106 = scmp.ne.s32.totalorder %s101, %s103
      %p107 = scmp.eq.s32.totalorder %s20, 0
      %p108 = por %p106, %p107
      %p109 = scmp.ne.s32.totalorder %s101, %s103
      %p110 = scmp.eq.s32.totalorder %s25, 1
      %p111 = por %p109, %p110
      %p112 = scmp.ne.s32.totalorder %s103, %s104
      %p113 = scmp.eq.s32.totalorder %s25, 0
      %p114 = por %p112, %p113
      %p115 = scmp.ne.s32.totalorder %s103, %s104
      %p116 = scmp.eq.s32.totalorder %s26, 1
      %p117 = por %p115, %p116
      %p119 = scmp.ne.s32.totalorder %s104, %s118
      %p120 = scmp.eq.s32.totalorder %s26, 0
      %p121 = por %p119, %p120
      %s122 = ssub.s32 %s20, %s27
      %p123 = scmp.eq.s32.totalorder %s122, 0
      %s125 = sadd.s32 %s124, 1
      %s126 = scalar_select %p123, %s124, %s125
      %p129 = pneg %p123
      %p130 = scmp.eq.s32.totalorder %s20, 1
      %p131 = por %p129, %p130
      %p132 = scmp.ne.s32.totalorder %s124, %s127
      %p133 = scmp.eq.s32.totalorder %s20, 0
      %p134 = por %p132, %p133
      %p135 = scmp.ne.s32.totalorder %s124, %s127
      %p136 = scmp.eq.s32.totalorder %s25, 1
      %p137 = por %p135, %p136
      %p138 = scmp.ne.s32.totalorder %s127, %s128
      %p139 = scmp.eq.s32.totalorder %s25, 0
      %p140 = por %p138, %p139
      %p141 = scmp.ne.s32.totalorder %s127, %s128
      %p142 = scmp.eq.s32.totalorder %s26, 1
      %p143 = por %p141, %p142
      %p145 = scmp.ne.s32.totalorder %s128, %s144
      %p146 = scmp.eq.s32.totalorder %s26, 0
      %p147 = por %p145, %p146
      %p148 = scmp.le.s32.totalorder 1, %s20
      %p149 = scmp.lt.s32.totalorder %s20, 3
      %p150 = pnand %p148, %p149
      %p151 = pneg %p150
      // Predicated region
      $region9: #{tpu_custom_call.1} parent=5 // pred_check
        _
      $region10: #{tpu_custom_call.1} parent=5 // pred_check_branch
        %153 = sbr.rel (%p150) target = $region12
      $region11: #{tpu_custom_call.1} parent=5 // pred_region
        %s154 = ssub.s32 %s20, 1
        // Predicated region
        $region13: #{tpu_custom_call.1} parent=11 // pred_check
          %p155 = pneg %p93
        $region14: #{tpu_custom_call.1} parent=11 // pred_check_branch
          %157 = sbr.rel (%p155) target = $region16
        $region15: #{tpu_custom_call.1} parent=11 // pred_region
          %s159 = ssub.s32 512, 512
          %160 = vsyncadd [#allocation6], %s159
          %s161 = sshll.u32 [#allocation7], 4
          %s162 = int_to_ptr.vmem [resolvable:$true] %s161
          %167 = dma.hbm_to_vmem [thread:$0]  %s2, 512, %s162, [#allocation6], 128, 128, 8
        $region16: #{tpu_custom_call.1} parent=11 // pred_fallthru
          _
        // Predicated region
        $region17: #{tpu_custom_call.1} parent=11 // pred_check
          %p168 = pneg %p114
        $region18: #{tpu_custom_call.1} parent=11 // pred_check_branch
          %170 = sbr.rel (%p168) target = $region20
        $region19: #{tpu_custom_call.1} parent=11 // pred_region
          %s172 = ssub.s32 16, 16
          %173 = vsyncadd [#allocation9], %s172
          %s175 = sshll.u32 [#allocation8], 4
          %s176 = int_to_ptr.vmem [resolvable:$true] %s175
          %178 = dma.hbm_to_vmem [thread:$0]  %s3, 16, %s176, [#allocation9]
        $region20: #{tpu_custom_call.1} parent=11 // pred_fallthru
          _
      $region12: #{tpu_custom_call.1} parent=5 // pred_fallthru
        _
      %p179 = scmp.lt.s32.totalorder %s20, 2
      // Predicated region
      $region21: #{tpu_custom_call.1} parent=5 // pred_check
        %p180 = pneg %p179
      $region22: #{tpu_custom_call.1} parent=5 // pred_check_branch
        %182 = sbr.rel (%p180) target = $region24
      $region23: #{tpu_custom_call.1} parent=5 // pred_region
        // Predicated region
        $region25: #{tpu_custom_call.1} parent=23 // pred_check
          %p183 = pneg %p40
        $region26: #{tpu_custom_call.1} parent=23 // pred_check_branch
          %185 = sbr.rel (%p183) target = $region28
        $region27: #{tpu_custom_call.1} parent=23 // pred_region
          %s186 = sand.u32 %s30, 1
          %s187 = scalar_lea.sflag [#allocation3], %s186
          %s188 = sand.u32 %s30, 1
          %s189 = smul.addr %s188, 16
          %s190 = scalar_lea.vmem [#allocation2], %s189
          %s192 = ssub.s32 256, 256
          %193 = vsyncadd %s187, %s192
          %s194 = smul.addr %s20, 2
          %s195 = smul.addr %s194, 128
          %s196 = scalar_lea.hbm %s0, %s195
          %s197 = sshll.u32 %s190, 4
          %s198 = int_to_ptr.vmem [resolvable:$true] %s197
          %203 = dma.hbm_to_vmem [thread:$0]  %s196, 256, %s198, %s187, 128, 128, 8
        $region28: #{tpu_custom_call.1} parent=23 // pred_fallthru
          _
        // Predicated region
        $region29: #{tpu_custom_call.1} parent=23 // pred_check
          %p204 = pneg %p66
        $region30: #{tpu_custom_call.1} parent=23 // pred_check_branch
          %206 = sbr.rel (%p204) target = $region32
        $region31: #{tpu_custom_call.1} parent=23 // pred_region
          %s207 = sand.u32 %s20, 1
          %s208 = scalar_lea.sflag [#allocation6], %s207
          %s209 = sand.u32 %s56, 1
          %s210 = smul.addr %s209, 4
          %s211 = scalar_lea.vmem [#allocation5], %s210
          %s213 = ssub.s32 64, 64
          %214 = vsyncadd %s208, %s213
          %s215 = smul.addr %s20, 2
          %s216 = smul.addr %s215, 32
          %s217 = scalar_lea.hbm %s1, %s216
          %s218 = sshll.u32 %s211, 4
          %s219 = int_to_ptr.vmem [resolvable:$true] %s218
          %224 = dma.hbm_to_vmem [thread:$0]  %s217, 64, %s219, %s208, 32, 32, 2
        $region32: #{tpu_custom_call.1} parent=23 // pred_fallthru
          _
      $region24: #{tpu_custom_call.1} parent=5 // pred_fallthru
        _
      %p225 = scmp.le.s32.totalorder 1, %s20
      %p226 = scmp.lt.s32.totalorder %s20, 3
      %p227 = pnand %p225, %p226
      %p228 = pneg %p227
      // Predicated region
      $region33: #{tpu_custom_call.1} parent=5 // pred_check
        _
      $region34: #{tpu_custom_call.1} parent=5 // pred_check_branch
        %230 = sbr.rel (%p227) target = $region36
      $region35: #{tpu_custom_call.1} parent=5 // pred_region
        %s231 = ssub.s32 %s20, 1
        %s232 = sand.u32 %s33, 1
        %s233 = scalar_lea.sflag [#allocation3], %s232
        %s234 = sand.u32 %s33, 1
        %s235 = smul.addr %s234, 16
        %s236 = scalar_lea.vmem [#allocation2], %s235
        // Predicated region
        $region37: #{tpu_custom_call.1} parent=35 // pred_check
          %p237 = pneg %p46
        $region38: #{tpu_custom_call.1} parent=35 // pred_check_branch
          %239 = sbr.rel (%p237) target = $region40
        $region39: #{tpu_custom_call.1} parent=35 // pred_region
          %240 = dma.done %s233, 256
        $region40: #{tpu_custom_call.1} parent=35 // pred_fallthru
          _
        %s241 = sand.u32 %s25, 1
        %s242 = scalar_lea.sflag [#allocation6], %s241
        %s243 = sand.u32 %s59, 1
        %s244 = smul.addr %s243, 4
        %s245 = scalar_lea.vmem [#allocation5], %s244
        // Predicated region
        $region41: #{tpu_custom_call.1} parent=35 // pred_check
          %p246 = pneg %p72
        $region42: #{tpu_custom_call.1} parent=35 // pred_check_branch
          %248 = sbr.rel (%p246) target = $region44
        $region43: #{tpu_custom_call.1} parent=35 // pred_region
          %249 = dma.done %s242, 64
        $region44: #{tpu_custom_call.1} parent=35 // pred_fallthru
          _
        // Predicated region
        $region45: #{tpu_custom_call.1} parent=35 // pred_check
          %p250 = pneg %p93
        $region46: #{tpu_custom_call.1} parent=35 // pred_check_branch
          %252 = sbr.rel (%p250) target = $region48
        $region47: #{tpu_custom_call.1} parent=35 // pred_region
          %253 = dma.done [#allocation6], 512
        $region48: #{tpu_custom_call.1} parent=35 // pred_fallthru
          _
        // Predicated region
        $region49: #{tpu_custom_call.1} parent=35 // pred_check
          %p254 = pneg %p114
        $region50: #{tpu_custom_call.1} parent=35 // pred_check_branch
          %256 = sbr.rel (%p254) target = $region52
        $region51: #{tpu_custom_call.1} parent=35 // pred_region
          %257 = dma.done [#allocation9], 16
        $region52: #{tpu_custom_call.1} parent=35 // pred_fallthru
          _
        %s258 = sand.u32 %s33, 1
        %s259 = scalar_lea.sflag [#allocation3], %s258
        %s260 = sand.u32 %s33, 1
        %s261 = smul.addr %s260, 16
        %s262 = scalar_lea.vmem [#allocation2], %s261
        %p263 = pneg %p46
        %p264 = pneg %p43
        %s265 = sand.u32 %s25, 1
        %s266 = scalar_lea.sflag [#allocation6], %s265
        %s267 = sand.u32 %s59, 1
        %s268 = smul.addr %s267, 4
        %s269 = scalar_lea.vmem [#allocation5], %s268
        %p270 = pneg %p72
        %p271 = pneg %p69
        %p272 = pneg %p93
        %p273 = pneg %p90
        %p274 = pneg %p114
        %p275 = pneg %p111
        %p276 = pneg %p140
        %p277 = pneg %p137
        %s278 = sand.u32 %s127, 1
        %s279 = scalar_lea.sflag [#allocation4], %s278
        %s280 = sand.u32 %s127, 1
        %s281 = smul.addr %s280, 16
        %s282 = scalar_lea.vmem [#allocation10], %s281
        %v285 = vld [vmem:[%s236] sm:$0xff]
        %v286 = vld [vmem:[%s236 + $0x8] sm:$0xff]
        %v287 = vld [vmem:[#allocation7] sm:$0xff]
        %v288 = vld [vmem:[#allocation7 + $0x8] sm:$0xff]
        %v289 = vld [vmem:[#allocation7 + $0x10] sm:$0xff]
        %v290 = vld [vmem:[#allocation7 + $0x18] sm:$0xff]
        %v291 = vld [vmem:[#allocation8] sm:$0x1]
        %vm292 = vcmask 261120
        %v294 = vsel %vm292, %v285, 0
        %v297 = vsel %vm292, %v286, 0
        %299 = vmatprep.subr.mxu0 0.0
        %300 = vmatpush1.msra.mxu0 %v287
        %301 = vmatprep.subr.mxu0 0.0
        %302 = vmatpush1.msra.mxu0 %v288
        %303 = vmatprep.subr.mxu0 0.0
        %304 = vmatpush1.msra.mxu0 %v289
        %305 = vmatprep.subr.mxu0 0.0
        %306 = vmatpush1.msra.mxu0 %v290
        %307 = vmatprep.subr.mxu0 0.0
        %308 = vmatpush1.msra.mxu0 0.0
        %309 = vmatprep.subr.mxu0 0.0
        %310 = vmatpush1.msra.mxu0 0.0
        %311 = vmatprep.subr.mxu0 0.0
        %312 = vmatpush1.msra.mxu0 0.0
        %313 = vmatprep.subr.mxu0 0.0
        %314 = vmatpush1.msra.mxu0 0.0
        %315 = vmatprep.subr.mxu0 0.0
        %316 = vmatpush1.msra.mxu0 0.0
        %317 = vmatprep.subr.mxu0 0.0
        %318 = vmatpush1.msra.mxu0 0.0
        %319 = vmatprep.subr.mxu0 0.0
        %320 = vmatpush1.msra.mxu0 0.0
        %321 = vmatprep.subr.mxu0 0.0
        %322 = vmatpush1.msra.mxu0 0.0
        %323 = vmatprep.subr.mxu0 0.0
        %324 = vmatpush1.msra.mxu0 0.0
        %325 = vmatprep.subr.mxu0 0.0
        %326 = vmatpush1.msra.mxu0 0.0
        %327 = vmatprep.subr.mxu0 0.0
        %328 = vmatpush1.msra.mxu0 0.0
        %329 = vmatprep.subr.mxu0 0.0
        %330 = vmatpush1.msra.mxu0 0.0
        %331 = vmatprep.subr.mxu0 0.0
        %332 = vmatpush1.msra.mxu0 0.0
        %333 = vmatprep.subr.mxu0 0.0
        %334 = vmatpush1.msra.mxu0 0.0
        %335 = vmatprep.subr.mxu0 0.0
        %336 = vmatpush1.msra.mxu0 0.0
        %337 = vmatprep.subr.mxu0 0.0
        %338 = vmatpush1.msra.mxu0 0.0
        %339 = vmatprep.subr.mxu0 0.0
        %340 = vmatpush1.msra.mxu0 0.0
        %341 = vmatprep.subr.mxu0 0.0
        %342 = vmatpush1.msra.mxu0 0.0
        %343 = vmatprep.subr.mxu0 0.0
        %344 = vmatpush1.msra.mxu0 0.0
        %345 = vmatprep.subr.mxu0 0.0
        %346 = vmatpush1.msra.mxu0 0.0
        %347 = vmatprep.subr.mxu0 0.0
        %348 = vmatpush1.msra.mxu0 0.0
        %349 = vmatprep.subr.mxu0 0.0
        %350 = vmatpush1.msra.mxu0 0.0
        %351 = vmatprep.subr.mxu0 0.0
        %352 = vmatpush1.msra.mxu0 0.0
        %353 = vmatprep.subr.mxu0 0.0
        %354 = vmatpush1.msra.mxu0 0.0
        %355 = vmatprep.subr.mxu0 0.0
        %356 = vmatpush1.msra.mxu0 0.0
        %357 = vmatprep.subr.mxu0 0.0
        %358 = vmatpush1.msra.mxu0 0.0
        %359 = vmatprep.subr.mxu0 0.0
        %360 = vmatpush1.msra.mxu0 0.0
        %361 = vmatprep.subr.mxu0 0.0
        %362 = vmatpush1.msra.mxu0 0.0
        %363 = vmatprep.mubr.f32.mxu0 0.0
        %364 = vmatmul.mubr.f32.gmra.mrb[0].mxu0 %v294
        %v365 = vpop.f32.mrb[0].mxu0
        %v366 = vadd.f32 0.0, %v365
        %v367 = vpop.f32.mrb[0].mxu0
        %368 = vmatprep.mubr.f32.mxu0 0.0
        %369 = vmatmul.mubr.f32.gmra.mrb[0].mxu0 %v297
        %v370 = vpop.f32.mrb[0].mxu0
        %v371 = vadd.f32 0.0, %v370
        %v372 = vpop.f32.mrb[0].mxu0
        %373 = vdwg.mxu0
        %v375 = vsel %vm292, %v291, 0
        %377 = vmatprep.subr.mxu0 0.0
        %378 = vmatpush1.xpose.msra.mxu0 %v294
        %379 = vmatprep.subr.mxu0 0.0
        %380 = vmatpush1.xpose.msra.mxu0 %v297
        %381 = vmatprep.subr.mxu0 0.0
        %382 = vmatpush1.xpose.msra.mxu0 0.0
        %383 = vmatprep.subr.mxu0 0.0
        %384 = vmatpush1.xpose.msra.mxu0 0.0
        %385 = vmatprep.subr.mxu0 0.0
        %386 = vmatpush1.xpose.msra.mxu0 0.0
        %387 = vmatprep.subr.mxu0 0.0
        %388 = vmatpush1.xpose.msra.mxu0 0.0
        %389 = vmatprep.subr.mxu0 0.0
        %390 = vmatpush1.xpose.msra.mxu0 0.0
        %391 = vmatprep.subr.mxu0 0.0
        %392 = vmatpush1.xpose.msra.mxu0 0.0
        %393 = vmatprep.subr.mxu0 0.0
        %394 = vmatpush1.xpose.msra.mxu0 0.0
        %395 = vmatprep.subr.mxu0 0.0
        %396 = vmatpush1.xpose.msra.mxu0 0.0
        %397 = vmatprep.subr.mxu0 0.0
        %398 = vmatpush1.xpose.msra.mxu0 0.0
        %399 = vmatprep.subr.mxu0 0.0
        %400 = vmatpush1.xpose.msra.mxu0 0.0
        %401 = vmatprep.subr.mxu0 0.0
        %402 = vmatpush1.xpose.msra.mxu0 0.0
        %403 = vmatprep.subr.mxu0 0.0
        %404 = vmatpush1.xpose.msra.mxu0 0.0
        %405 = vmatprep.subr.mxu0 0.0
        %406 = vmatpush1.xpose.msra.mxu0 0.0
        %407 = vmatprep.subr.mxu0 0.0
        %408 = vmatpush1.xpose.msra.mxu0 0.0
        %409 = vmatprep.subr.mxu0 0.0
        %410 = vmatpush1.xpose.msra.mxu0 0.0
        %411 = vmatprep.subr.mxu0 0.0
        %412 = vmatpush1.xpose.msra.mxu0 0.0
        %413 = vmatprep.subr.mxu0 0.0
        %414 = vmatpush1.xpose.msra.mxu0 0.0
        %415 = vmatprep.subr.mxu0 0.0
        %416 = vmatpush1.xpose.msra.mxu0 0.0
        %417 = vmatprep.subr.mxu0 0.0
        %418 = vmatpush1.xpose.msra.mxu0 0.0
        %419 = vmatprep.subr.mxu0 0.0
        %420 = vmatpush1.xpose.msra.mxu0 0.0
        %421 = vmatprep.subr.mxu0 0.0
        %422 = vmatpush1.xpose.msra.mxu0 0.0
        %423 = vmatprep.subr.mxu0 0.0
        %424 = vmatpush1.xpose.msra.mxu0 0.0
        %425 = vmatprep.subr.mxu0 0.0
        %426 = vmatpush1.xpose.msra.mxu0 0.0
        %427 = vmatprep.subr.mxu0 0.0
        %428 = vmatpush1.xpose.msra.mxu0 0.0
        %429 = vmatprep.subr.mxu0 0.0
        %430 = vmatpush1.xpose.msra.mxu0 0.0
        %431 = vmatprep.subr.mxu0 0.0
        %432 = vmatpush1.xpose.msra.mxu0 0.0
        %433 = vmatprep.subr.mxu0 0.0
        %434 = vmatpush1.xpose.msra.mxu0 0.0
        %435 = vmatprep.subr.mxu0 0.0
        %436 = vmatpush1.xpose.msra.mxu0 0.0
        %437 = vmatprep.subr.mxu0 0.0
        %438 = vmatpush1.xpose.msra.mxu0 0.0
        %439 = vmatprep.subr.mxu0 0.0
        %440 = vmatpush1.xpose.msra.mxu0 0.0
        %441 = vmatprep.mubr.f32.mxu0 0.0
        %442 = vmatmul.mubr.f32.gmra.mrb[0].mxu0 %v375
        %v443 = vpop.f32.mrb[0].mxu0
        %v444 = vadd.f32 0.0, %v443
        %v445 = vpop.f32.mrb[0].mxu0
        %446 = vdwg.mxu0
        %448 = vset.pattern.permute.xlu0 32
        %449 = vperm.xlu0 %448, %v366
        %v450 = vpop.permute.xlu0 %449
        %453 = vset.pattern.permute.xlu0 32
        %454 = vperm.xlu0 %453, %v371
        %v455 = vpop.permute.xlu0 %454
        %v457 = vlaneseq
        %v458 = vshrl.u32 %v457, 7
        %v459 = vsub.s32 0, %v458
        %v460 = vrot.slane %v444, %v459
        %v461 = vadd.f32 %v450, %v460
        %v462 = vadd.f32 %v455, %v460
        %vm463 = vcmp.gt.f32.partialorder %v461, 0.0
        %vm464 = vcmp.gt.f32.partialorder %v462, 0.0
        %v465 = vmul.f32 %v461, 0.2
        %v466 = vmul.f32 %v462, 0.2
        %v467 = vsel %vm463, %v461, %v465
        %v468 = vsel %vm464, %v462, %v466
        %v469 = vld [vmem:[%s245] sm:$0x3]
        %v470 = vld [vmem:[%s245 + $0x2] sm:$0x3]
        %vm471 = vnez %v469
        %vm472 = vnez %v470
        %v473 = vsel %vm471, 16843009, 0
        %v474 = vsel %vm472, 16843009, 0
        %v475 = vunpack.c.0.s8 %v473
        %v476 = vunpack.c.0.s8 %v474
        %vm477 = vcmp.ne.s32.totalorder %v475, 0
        %vm478 = vcmp.ne.s32.totalorder %v476, 0
        %v479 = vsel %vm477, %v467, -9e+15
        %v480 = vsel %vm478, %v468, -9e+15
        %vm481 = vcmask 130048
        %v482 = vsel %vm481, %v479, -inf
        %483 = vmax.xlane.f32.xlu0 %v482
        %v484 = vpop.xlane.xlu0 %483
        %v485 = vsel %vm481, %v480, -inf
        %486 = vmax.xlane.f32.xlu0 %v485
        %v487 = vpop.xlane.xlu0 %486
        %v488 = vsub.f32 %v479, %v484
        %v489 = vsub.f32 %v480, %v487
        %v490 = vmul.f32 %v488, 1.442695
        %v491 = vpow.pop %v490
        %v492 = vmul.f32 %v489, 1.442695
        %v493 = vpow.pop %v492
        %v494 = vsel %vm481, %v491, 0.0
        %495 = vadd.xlane.f32.xlu0 %v494
        %v496 = vpop.xlane.xlu0 %495
        %v497 = vsel %vm481, %v493, 0.0
        %498 = vadd.xlane.f32.xlu0 %v497
        %v499 = vpop.xlane.xlu0 %498
        %v500 = vrcp.pop %v496
        %v501 = vrcp.pop %v499
        %v502 = vmul.f32 %v496, %v500
        %v503 = vmul.f32 %v499, %v501
        %v504 = vsub.f32 2.0, %v502
        %v505 = vsub.f32 2.0, %v503
        %v506 = vmul.f32 %v500, %v504
        %v507 = vmul.f32 %v501, %v505
        %v508 = vmul.f32 %v491, %v506
        %v509 = vmul.f32 %v493, %v507
        %v511 = vsel %vm481, %v508, 0
        %v514 = vsel %vm481, %v509, 0
        %516 = vmatprep.subr.mxu0 0.0
        %517 = vmatpush1.msra.mxu0 %v366
        %518 = vmatprep.subr.mxu0 0.0
        %519 = vmatpush1.msra.mxu0 %v371
        %520 = vmatprep.subr.mxu0 0.0
        %521 = vmatpush1.msra.mxu0 0.0
        %522 = vmatprep.subr.mxu0 0.0
        %523 = vmatpush1.msra.mxu0 0.0
        %524 = vmatprep.subr.mxu0 0.0
        %525 = vmatpush1.msra.mxu0 0.0
        %526 = vmatprep.subr.mxu0 0.0
        %527 = vmatpush1.msra.mxu0 0.0
        %528 = vmatprep.subr.mxu0 0.0
        %529 = vmatpush1.msra.mxu0 0.0
        %530 = vmatprep.subr.mxu0 0.0
        %531 = vmatpush1.msra.mxu0 0.0
        %532 = vmatprep.subr.mxu0 0.0
        %533 = vmatpush1.msra.mxu0 0.0
        %534 = vmatprep.subr.mxu0 0.0
        %535 = vmatpush1.msra.mxu0 0.0
        %536 = vmatprep.subr.mxu0 0.0
        %537 = vmatpush1.msra.mxu0 0.0
        %538 = vmatprep.subr.mxu0 0.0
        %539 = vmatpush1.msra.mxu0 0.0
        %540 = vmatprep.subr.mxu0 0.0
        %541 = vmatpush1.msra.mxu0 0.0
        %542 = vmatprep.subr.mxu0 0.0
        %543 = vmatpush1.msra.mxu0 0.0
        %544 = vmatprep.subr.mxu0 0.0
        %545 = vmatpush1.msra.mxu0 0.0
        %546 = vmatprep.subr.mxu0 0.0
        %547 = vmatpush1.msra.mxu0 0.0
        %548 = vmatprep.subr.mxu0 0.0
        %549 = vmatpush1.msra.mxu0 0.0
        %550 = vmatprep.subr.mxu0 0.0
        %551 = vmatpush1.msra.mxu0 0.0
        %552 = vmatprep.subr.mxu0 0.0
        %553 = vmatpush1.msra.mxu0 0.0
        %554 = vmatprep.subr.mxu0 0.0
        %555 = vmatpush1.msra.mxu0 0.0
        %556 = vmatprep.subr.mxu0 0.0
        %557 = vmatpush1.msra.mxu0 0.0
        %558 = vmatprep.subr.mxu0 0.0
        %559 = vmatpush1.msra.mxu0 0.0
        %560 = vmatprep.subr.mxu0 0.0
        %561 = vmatpush1.msra.mxu0 0.0
        %562 = vmatprep.subr.mxu0 0.0
        %563 = vmatpush1.msra.mxu0 0.0
        %564 = vmatprep.subr.mxu0 0.0
        %565 = vmatpush1.msra.mxu0 0.0
        %566 = vmatprep.subr.mxu0 0.0
        %567 = vmatpush1.msra.mxu0 0.0
        %568 = vmatprep.subr.mxu0 0.0
        %569 = vmatpush1.msra.mxu0 0.0
        %570 = vmatprep.subr.mxu0 0.0
        %571 = vmatpush1.msra.mxu0 0.0
        %572 = vmatprep.subr.mxu0 0.0
        %573 = vmatpush1.msra.mxu0 0.0
        %574 = vmatprep.subr.mxu0 0.0
        %575 = vmatpush1.msra.mxu0 0.0
        %576 = vmatprep.subr.mxu0 0.0
        %577 = vmatpush1.msra.mxu0 0.0
        %578 = vmatprep.subr.mxu0 0.0
        %579 = vmatpush1.msra.mxu0 0.0
        %580 = vmatprep.mubr.f32.mxu0 0.0
        %581 = vmatmul.mubr.f32.gmra.mrb[0].mxu0 %v511
        %v582 = vpop.f32.mrb[0].mxu0
        %v583 = vadd.f32 0.0, %v582
        %v584 = vpop.f32.mrb[0].mxu0
        %585 = vmatprep.mubr.f32.mxu0 0.0
        %586 = vmatmul.mubr.f32.gmra.mrb[0].mxu0 %v514
        %v587 = vpop.f32.mrb[0].mxu0
        %v588 = vadd.f32 0.0, %v587
        %v589 = vpop.f32.mrb[0].mxu0
        %590 = vdwg.mxu0
        %v591 = vmin.f32 %v583, 0.0
        %v592 = vmin.f32 %v588, 0.0
        %v593 = vmul.f32 %v591, 0.5
        %v594 = vmul.f32 %v592, 0.5
        %v595 = vtanh.pop %v593
        %v596 = vtanh.pop %v594
        %vm597 = vcmp.gt.f32.partialorder %v583, 0.0
        %vm598 = vcmp.gt.f32.partialorder %v588, 0.0
        %v599 = vmul.f32 %v595, 2.0
        %v600 = vmul.f32 %v596, 2.0
        %v601 = vsub.f32 1.0, %v595
        %v602 = vsub.f32 1.0, %v596
        %v603 = vrcp.pop %v601
        %v604 = vmul.f32 %v599, %v603
        %v605 = vrcp.pop %v602
        %v606 = vmul.f32 %v600, %v605
        %v607 = vsel %vm597, %v583, %v604
        %v608 = vsel %vm598, %v588, %v606
        %609 = vst [vmem:[%s282] sm:$0xff] %v607
        %610 = vst [vmem:[%s282 + $0x8] sm:$0xff] %v608
        %s611 = sand.u32 %s127, 1
        %s612 = scalar_lea.sflag [#allocation4], %s611
        %s613 = sand.u32 %s127, 1
        %s614 = smul.addr %s613, 16
        %s615 = scalar_lea.vmem [#allocation10], %s614
        // Predicated region
        $region53: #{tpu_custom_call.1} parent=35 // pred_check
          %p616 = pneg %p137
        $region54: #{tpu_custom_call.1} parent=35 // pred_check_branch
          %618 = sbr.rel (%p616) target = $region56
        $region55: #{tpu_custom_call.1} parent=35 // pred_region
          %s620 = ssub.s32 256, 256
          %621 = vsyncadd %s612, %s620
          %s622 = smul.addr %s25, 2
          %s623 = smul.addr %s622, 128
          %s624 = scalar_lea.hbm %s4, %s623
          %s625 = sshll.u32 %s615, 4
          %s626 = int_to_ptr.vmem [resolvable:$true] %s625
          %631 = dma.vmem_to_hbm [thread:$0]  %s626, 256, %s624, %s612, 128, 128, 8
        $region56: #{tpu_custom_call.1} parent=35 // pred_fallthru
          _
      $region36: #{tpu_custom_call.1} parent=5 // pred_fallthru
        _
      %p632 = scmp.le.s32.totalorder 2, %s20
      // Predicated region
      $region57: #{tpu_custom_call.1} parent=5 // pred_check
        %p633 = pneg %p632
      $region58: #{tpu_custom_call.1} parent=5 // pred_check_branch
        %635 = sbr.rel (%p633) target = $region60
      $region59: #{tpu_custom_call.1} parent=5 // pred_region
        %s636 = ssub.s32 %s20, 2
        // Predicated region
        $region61: #{tpu_custom_call.1} parent=59 // pred_check
          %p637 = pneg %p143
        $region62: #{tpu_custom_call.1} parent=59 // pred_check_branch
          %639 = sbr.rel (%p637) target = $region64
        $region63: #{tpu_custom_call.1} parent=59 // pred_region
          %s640 = sand.u32 %s128, 1
          %s641 = scalar_lea.sflag [#allocation4], %s640
          %s642 = sand.u32 %s128, 1
          %s643 = smul.addr %s642, 16
          %s644 = scalar_lea.vmem [#allocation10], %s643
          %645 = dma.done %s641, 256
        $region64: #{tpu_custom_call.1} parent=59 // pred_fallthru
          _
      $region60: #{tpu_custom_call.1} parent=5 // pred_fallthru
        _
    $region6: #{tpu_custom_call.1} parent=1 // loop_footer
      %s24 = sadd.s32 1, %s20
    $region7: #{tpu_custom_call.1} parent=1 // loop_footer_branch
      %19 = sbr.rel target = $region3
    $region8: #{tpu_custom_call.1} parent=1 // loop_exit
      _
    %646 = vsyncpa [#allocation3], 1
    %s647 = scalar_lea.sflag [#allocation3], 1
    %648 = vsyncpa %s647, 1
    %649 = vsyncpa [#allocation6], 1
    %s650 = scalar_lea.sflag [#allocation6], 1
    %651 = vsyncpa %s650, 1
    %652 = vsyncpa [#allocation9], 1
    %653 = vsyncpa [#allocation4], 1
    %s654 = scalar_lea.sflag [#allocation4], 1
    %655 = vsyncpa %s654, 1

</llo_original>
